<compile_context>
chip_gen: v5e
topology: v5e:2x2
jax: 0.10.0
libtpu: 0.0.40
codegen_flags: <defaults>
</compile_context>

<pallas_src>
import functools

import jax
import jax.numpy as jnp
from jax.experimental import pallas as pl
from jax.experimental.pallas import tpu as pltpu


def _elu(x, alpha):
    # exp only on the non-positive side to avoid overflow for large positives.
    xn = jnp.minimum(x, 0.0)
    return jnp.where(x > 0, x, alpha * (jnp.exp(xn) - 1.0))


def _round_up(x, m):
    return ((x + m - 1) // m) * m


def _tile_bytes(tile_t, c, h, k0, xb, wb, ob):
    """Rough per-grid-step VMEM working set (double-buffered I/O + temporaries)."""
    io = 2 * (c * tile_t * xb + 2 * c * 128 * xb + c * tile_t * ob)
    interm = (c * (tile_t + 8) * 4          # reflect-padded window (f32)
              + k0 * c * tile_t * wb        # stacked conv-1 operand
              + h * tile_t * (4 + wb)       # y0 (f32) + a1
              + c * tile_t * 4)             # y1 (f32)
    return io + interm


def _pick_tile_t(t, c, h, k0, xb, wb, ob, budget):
    t_cap = _round_up(t, 128)
    for cand in (4096, 2048, 1024, 512, 256, 128):
        if cand <= t_cap and _tile_bytes(cand, c, h, k0, xb, wb, ob) <= budget:
            return cand
    return 128


def _seanet_block_kernel(xc_ref, xl_ref, xr_ref, w0_ref, b0_ref, w1_ref, b1_ref,
                         out_ref, *, k0, dil0, pad_left, pad_right, tile_t, hb,
                         alpha):
    """One (time-tile, batch) grid step.

    xc_ref : (1, C, tile_t)   center tile of x (NCW)
    xl_ref : (1, C, hb)       hb-wide block just left of the tile (clamped at i==0)
    xr_ref : (1, C, hb)       hb-wide block just right of the tile (clamped at end)
    w0_ref : (H, k0*C)        first conv weights, taps fused along K
    b0_ref : (H, 1)
    w1_ref : (C, H)           second (1x1) conv weights
    b1_ref : (C, 1)
    out_ref: (1, C, tile_t)
    """
    i = pl.program_id(0)
    n_t = pl.num_programs(0)

    xc = xc_ref[0]                                    # (C, tile_t)
    xl = xl_ref[0]                                    # (C, hb)
    xr = xr_ref[0]                                    # (C, hb)

    # Assemble the reflect-padded window (C, tile_t + pad_left + pad_right)
    # from the center tile plus tiny halo slices (true reflection only at the
    # sequence edges; interior tiles read the neighbor blocks directly).
    pieces = []
    if pad_left > 0:
        left_int = xl[:, hb - pad_left:]                  # previous block's tail
        left_refl = jnp.concatenate(                      # x[pad_left], ..., x[1]
            [xl[:, pad_left - q:pad_left - q + 1] for q in range(pad_left)],
            axis=1)
        pieces.append(jnp.where(i == 0, left_refl, left_int))
    pieces.append(xc)
    if pad_right > 0:
        right_int = xr[:, :pad_right]                     # next block's head
        right_refl = jnp.concatenate(                     # x[T-2], x[T-3], ...
            [xr[:, hb - 2 - q:hb - 1 - q] for q in range(pad_right)], axis=1)
        pieces.append(jnp.where(i == n_t - 1, right_refl, right_int))
    xpad = jnp.concatenate(pieces, axis=1) if len(pieces) > 1 else xc

    # ELU in f32 (reflect padding commutes with elementwise ELU); matmuls in
    # the weights' dtype (bf16 weights -> bf16 MXU); accumulation in f32.
    a0 = _elu(xpad.astype(jnp.float32), alpha).astype(w0_ref.dtype)

    # Fuse the k0 dilation taps into one K = k0*C matmul: stack the shifted
    # windows along the channel (sublane) axis.
    a0_stacked = jnp.concatenate(
        [a0[:, j * dil0:j * dil0 + tile_t] for j in range(k0)], axis=0)
    y0 = jnp.dot(w0_ref[...], a0_stacked,
                 preferred_element_type=jnp.float32) + b0_ref[...]   # (H, tile_t)

    a1 = _elu(y0, alpha).astype(w1_ref.dtype)
    y1 = jnp.dot(w1_ref[...], a1,
                 preferred_element_type=jnp.float32) + b1_ref[...]   # (C, tile_t)

    # True-skip residual: reuse the already-loaded center tile.
    out_ref[0] = (xc.astype(jnp.float32) + y1).astype(out_ref.dtype)


def seanet_resnet_block(x_bct, w0_pt, b0, w1_pt, b1, *,
                        kernel_sizes=(3, 1), dilations=(3, 1), alpha=0.1,
                        tile_t=None, compute_dtype=None):
    """SEANet residual block forward.  x_bct: (B, C, T) (PyTorch NCW layout).

    w0_pt: (H, C, k0) first conv weight (PyTorch Conv1d layout), b0: (H,)
    w1_pt: (C, H, 1)  second (1x1) conv weight,                  b1: (C,)
    For bf16 I/O pass a bf16 x_bct and compute_dtype=jnp.bfloat16.
    Returns (B, C, T) in x_bct's dtype.
    """
    k0, k1 = kernel_sizes
    dil0, _dil1 = dilations
    assert k1 == 1, "second conv of the SEANet block is 1x1"
    B, C, T = x_bct.shape
    H = w0_pt.shape[0]

    # Non-causal SConv1d reflect padding: total = (k-1)*dilation,
    # right = total // 2, left = total - right.
    pad_total = (k0 - 1) * dil0
    pad_right = pad_total // 2
    pad_left = pad_total - pad_right
    assert T > max(pad_left, pad_right), "reflect padding requires T > pad"

    wdt = jnp.dtype(compute_dtype) if compute_dtype is not None else jnp.dtype(w0_pt.dtype)
    x_bytes = jnp.dtype(x_bct.dtype).itemsize
    out_bytes = x_bytes
    w_bytes = wdt.itemsize

    # ---- time tiling: largest 128-multiple tile that fits the VMEM budget ----
    budget = 20 * 1024 * 1024
    if tile_t is None:
        tile_t = _pick_tile_t(T, C, H, k0, x_bytes, w_bytes, out_bytes, budget)
    tile_t = max(128, _round_up(int(tile_t), 128))
    tile_t = min(tile_t, _round_up(T, 128))

    # ---- pad T up to a multiple of tile_t (no giant single-block fallback).
    # The first pad_right padded columns hold the reflected tail so outputs at
    # the true right edge stay exact; outputs in the padded region are cropped.
    T_pad = _round_up(T, tile_t)
    if T_pad > T and (T_pad - T) < pad_right:
        T_pad += tile_t
    if T_pad > T:
        extra = T_pad - T
        pieces = [x_bct]
        if pad_right > 0:
            pieces.append(x_bct[:, :, T - 1 - pad_right:T - 1][:, :, ::-1])
        pieces.append(jnp.zeros((B, C, extra - pad_right), x_bct.dtype))
        x_work = jnp.concatenate(pieces, axis=-1)
    else:
        x_work = x_bct

    n_t = T_pad // tile_t
    hb = 128                              # lane-aligned halo block
    n_hb = T_pad // hb
    r = tile_t // hb

    # Weight prep: PyTorch Conv1d (out, in, k) -> taps fused along K, tap-major:
    # w0_fused[:, j*C:(j+1)*C] = w0_pt[:, :, j]  (matches the in-kernel stacking).
    w0_fused = jnp.transpose(w0_pt, (0, 2, 1)).reshape(H, k0 * C).astype(wdt)
    w1_k = w1_pt[:, :, 0].astype(wdt)
    b0_k = b0.reshape(H, 1).astype(jnp.float32)
    b1_k = b1.reshape(C, 1).astype(jnp.float32)

    kernel = functools.partial(
        _seanet_block_kernel, k0=k0, dil0=dil0, pad_left=pad_left,
        pad_right=pad_right, tile_t=tile_t, hb=hb, alpha=alpha)

    # VMEM request: actual working set + weights + headroom, capped well under
    # v7x's 64 MiB physical VMEM.
    weight_bytes = (k0 * C * H + C * H) * w_bytes + (H + C) * 4
    need = _tile_bytes(tile_t, C, H, k0, x_bytes, w_bytes, out_bytes)
    vmem_limit = int(min(48 * 2**20, max(16 * 2**20, need + weight_bytes + 6 * 2**20)))

    cost = pl.CostEstimate(
        flops=2 * B * T_pad * H * C * (k0 + 1),
        transcendentals=B * T_pad * (C + H),
        bytes_accessed=B * C * T_pad * (x_bytes + out_bytes) + weight_bytes)

    out = pl.pallas_call(
        kernel,
        out_shape=jax.ShapeDtypeStruct((B, C, T_pad), x_bct.dtype),
        grid_spec=pltpu.PrefetchScalarGridSpec(
            num_scalar_prefetch=0,
            grid=(n_t, B),            # time tiles outermost -> megacore shards T
            in_specs=[
                # center tile
                pl.BlockSpec((1, C, tile_t), lambda i, b: (b, 0, i)),
                # left-neighbor halo block (clamped to block 0 at the edge)
                pl.BlockSpec((1, C, hb),
                             lambda i, b: (b, 0, jnp.maximum(i * r - 1, 0))),
                # right-neighbor halo block (clamped to the last block)
                pl.BlockSpec((1, C, hb),
                             lambda i, b: (b, 0, jnp.minimum((i + 1) * r,
                                                             n_hb - 1))),
                pl.BlockSpec((H, k0 * C), lambda i, b: (0, 0)),   # w0 (fused taps)
                pl.BlockSpec((H, 1), lambda i, b: (0, 0)),        # b0
                pl.BlockSpec((C, H), lambda i, b: (0, 0)),        # w1
                pl.BlockSpec((C, 1), lambda i, b: (0, 0)),        # b1
            ],
            out_specs=pl.BlockSpec((1, C, tile_t), lambda i, b: (b, 0, i)),
        ),
        compiler_params=pltpu.CompilerParams(
            dimension_semantics=("parallel", "parallel"),
            vmem_limit_bytes=vmem_limit),
        cost_estimate=cost,
    )(x_work, x_work, x_work, w0_fused, b0_k, w1_k, b1_k)
    return out[:, :, :T] if T_pad > T else out


def _reference(x_bct, w0_pt, b0, w1_pt, b1, *, k0=3, dil0=3, alpha=0.1):
    """Pure-JAX reference of the same forward (for correctness check)."""
    hp = jax.lax.Precision.HIGHEST
    x = jnp.transpose(x_bct, (0, 2, 1)).astype(jnp.float32)     # (B, T, C)
    T = x.shape[1]
    pad_total = (k0 - 1) * dil0
    pr = pad_total // 2
    pf = pad_total - pr
    xp = jnp.pad(x, ((0, 0), (pf, pr), (0, 0)), mode="reflect")
    a0 = _elu(xp, alpha)
    y0 = sum(jnp.einsum("btc,hc->bth", a0[:, j * dil0:j * dil0 + T, :],
                        w0_pt[:, :, j].astype(jnp.float32), precision=hp)
             for j in range(k0)) + b0
    a1 = _elu(y0, alpha)
    y1 = jnp.einsum("bth,ch->btc", a1, w1_pt[:, :, 0].astype(jnp.float32),
                    precision=hp) + b1
    return jnp.transpose(x + y1, (0, 2, 1))


if __name__ == "__main__":
    # Small shapes; T is deliberately NOT a multiple of 128 to exercise the
    # wrapper-side padding together with first / interior / last time tiles
    # (tile_t=128 -> 4 tiles) including the in-kernel reflection.
    B, dim, T = 2, 8, 500
    compress = 2
    hidd = dim // compress
    k0, k1 = 3, 1

    key = jax.random.PRNGKey(0)
    kw0, kb0, kw1, kb1, kx = jax.random.split(key, 5)
    # PyTorch Conv1d weight layout: (out_channels, in_channels, kernel_size)
    w0_pt = 0.2 * jax.random.normal(kw0, (hidd, dim, k0), jnp.float32)
    b0 = 0.1 * jax.random.normal(kb0, (hidd,), jnp.float32)
    w1_pt = 0.2 * jax.random.normal(kw1, (dim, hidd, k1), jnp.float32)
    b1 = 0.1 * jax.random.normal(kb1, (dim,), jnp.float32)
    x = jax.random.normal(kx, (B, dim, T), jnp.float32)          # NCW like PyTorch

    ref = _reference(x, w0_pt, b0, w1_pt, b1)

    # f32 path, small tile to exercise multi-tile + reflection + padding.
    out = seanet_resnet_block(x, w0_pt, b0, w1_pt, b1, tile_t=128)
    out = jax.block_until_ready(out)
    assert out.shape == (B, dim, T)
    assert jnp.allclose(out, ref, atol=3e-3, rtol=3e-3), "f32 mismatch vs reference"

    # bf16 I/O path (production config: halves HBM traffic); looser tolerance
    # since x, weights and the output are quantized to bf16.
    out_bf16 = seanet_resnet_block(x.astype(jnp.bfloat16), w0_pt, b0, w1_pt, b1,
                                   compute_dtype=jnp.bfloat16)
    out_bf16 = jax.block_until_ready(out_bf16)
    assert out_bf16.shape == (B, dim, T)
    assert out_bf16.dtype == jnp.bfloat16
    max_err = float(jnp.max(jnp.abs(out_bf16.astype(jnp.float32) - ref)))
    assert max_err < 1.5e-1, f"bf16 mismatch vs reference: {max_err}"

    print("KERNEL_OK")
</pallas_src>

<mosaic_0001>
module attributes {stable_mosaic.version = 11 : i64} {
  func.func @_seanet_block_kernel(%arg0: i32, %arg1: i32, %arg2: memref<1x8x128xf32, #tpu.memory_space<vmem>>, %arg3: memref<1x8x128xf32, #tpu.memory_space<vmem>>, %arg4: memref<1x8x128xf32, #tpu.memory_space<vmem>>, %arg5: memref<4x24xf32, #tpu.memory_space<vmem>>, %arg6: memref<4x1xf32, #tpu.memory_space<vmem>>, %arg7: memref<8x4xf32, #tpu.memory_space<vmem>>, %arg8: memref<8x1xf32, #tpu.memory_space<vmem>>, %arg9: memref<1x8x128xf32, #tpu.memory_space<vmem>>) attributes {dimension_semantics = [#tpu.dimension_semantics<parallel>, #tpu.dimension_semantics<parallel>], iteration_bounds = array<i64: 4, 2>, scalar_prefetch = 0 : i64, scratch_operands = 0 : i64, tpu.core_type = #tpu.core_type<tc>, window_params = [{transform_indices = @transform_0, window_bounds = array<i64: 1, 8, 128>}, {transform_indices = @transform_1, window_bounds = array<i64: 1, 8, 128>}, {transform_indices = @transform_2, window_bounds = array<i64: 1, 8, 128>}, {pipeline_mode = #tpu.pipeline_mode<synchronous>, transform_indices = @transform_3, window_bounds = array<i64: 4, 24>}, {pipeline_mode = #tpu.pipeline_mode<synchronous>, transform_indices = @transform_4, window_bounds = array<i64: 4, 1>}, {pipeline_mode = #tpu.pipeline_mode<synchronous>, transform_indices = @transform_5, window_bounds = array<i64: 8, 4>}, {pipeline_mode = #tpu.pipeline_mode<synchronous>, transform_indices = @transform_6, window_bounds = array<i64: 8, 1>}, {transform_indices = @transform_7, window_bounds = array<i64: 1, 8, 128>}]} {
    %c0 = arith.constant 0 : index
    %c0_0 = arith.constant 0 : index
    %c0_1 = arith.constant 0 : index
    %0 = vector.load %arg2[%c0, %c0_0, %c0_1] : memref<1x8x128xf32, #tpu.memory_space<vmem>>, vector<1x8x128xf32>
    %1 = vector.shape_cast %0 : vector<1x8x128xf32> to vector<8x128xf32>
    %c0_2 = arith.constant 0 : index
    %c0_3 = arith.constant 0 : index
    %c0_4 = arith.constant 0 : index
    %2 = vector.load %arg3[%c0_2, %c0_3, %c0_4] : memref<1x8x128xf32, #tpu.memory_space<vmem>>, vector<1x8x128xf32>
    %3 = vector.shape_cast %2 : vector<1x8x128xf32> to vector<8x128xf32>
    %c0_5 = arith.constant 0 : index
    %c0_6 = arith.constant 0 : index
    %c0_7 = arith.constant 0 : index
    %4 = vector.load %arg4[%c0_5, %c0_6, %c0_7] : memref<1x8x128xf32, #tpu.memory_space<vmem>>, vector<1x8x128xf32>
    %5 = vector.shape_cast %4 : vector<1x8x128xf32> to vector<8x128xf32>
    %6 = vector.extract_strided_slice %3 {offsets = [0, 125], sizes = [8, 3], strides = [1, 1]} : vector<8x128xf32> to vector<8x3xf32>
    %7 = vector.extract_strided_slice %3 {offsets = [0, 3], sizes = [8, 1], strides = [1, 1]} : vector<8x128xf32> to vector<8x1xf32>
    %8 = vector.extract_strided_slice %3 {offsets = [0, 2], sizes = [8, 1], strides = [1, 1]} : vector<8x128xf32> to vector<8x1xf32>
    %9 = vector.extract_strided_slice %3 {offsets = [0, 1], sizes = [8, 1], strides = [1, 1]} : vector<8x128xf32> to vector<8x1xf32>
    %10 = tpu.concatenate %7, %8, %9 in 1 : vector<8x1xf32>, vector<8x1xf32>, vector<8x1xf32> -> vector<8x3xf32>
    %c0_i32 = arith.constant 0 : i32
    %11 = arith.cmpi eq, %arg0, %c0_i32 : i32
    %12 = arith.select %11, %10, %6 : vector<8x3xf32>
    %13 = vector.extract_strided_slice %5 {offsets = [0, 0], sizes = [8, 3], strides = [1, 1]} : vector<8x128xf32> to vector<8x3xf32>
    %14 = vector.extract_strided_slice %5 {offsets = [0, 126], sizes = [8, 1], strides = [1, 1]} : vector<8x128xf32> to vector<8x1xf32>
    %15 = vector.extract_strided_slice %5 {offsets = [0, 125], sizes = [8, 1], strides = [1, 1]} : vector<8x128xf32> to vector<8x1xf32>
    %16 = vector.extract_strided_slice %5 {offsets = [0, 124], sizes = [8, 1], strides = [1, 1]} : vector<8x128xf32> to vector<8x1xf32>
    %17 = tpu.concatenate %14, %15, %16 in 1 : vector<8x1xf32>, vector<8x1xf32>, vector<8x1xf32> -> vector<8x3xf32>
    %c3_i32 = arith.constant 3 : i32
    %18 = arith.cmpi eq, %arg0, %c3_i32 : i32
    %19 = arith.select %18, %17, %13 : vector<8x3xf32>
    %20 = tpu.concatenate %12, %1, %19 in 1 : vector<8x3xf32>, vector<8x128xf32>, vector<8x3xf32> -> vector<8x134xf32>
    %cst = arith.constant 0.000000e+00 : f32
    %21 = vector.broadcast %cst : f32 to vector<8x134xf32>
    %22 = arith.minimumf %20, %21 : vector<8x134xf32>
    %cst_8 = arith.constant 0.000000e+00 : f32
    %23 = vector.broadcast %cst_8 : f32 to vector<8x134xf32>
    %24 = arith.cmpf ogt, %20, %23 : vector<8x134xf32>
    %25 = math.exp %22 : vector<8x134xf32>
    %cst_9 = arith.constant 1.000000e+00 : f32
    %26 = vector.broadcast %cst_9 : f32 to vector<8x134xf32>
    %27 = arith.subf %25, %26 : vector<8x134xf32>
    %cst_10 = arith.constant 1.000000e-01 : f32
    %28 = vector.broadcast %cst_10 : f32 to vector<8x134xf32>
    %29 = arith.mulf %28, %27 : vector<8x134xf32>
    %30 = arith.select %24, %20, %29 : vector<8x134xi1>, vector<8x134xf32>
    %31 = vector.extract_strided_slice %30 {offsets = [0, 0], sizes = [8, 128], strides = [1, 1]} : vector<8x134xf32> to vector<8x128xf32>
    %32 = vector.extract_strided_slice %30 {offsets = [0, 3], sizes = [8, 128], strides = [1, 1]} : vector<8x134xf32> to vector<8x128xf32>
    %33 = vector.extract_strided_slice %30 {offsets = [0, 6], sizes = [8, 128], strides = [1, 1]} : vector<8x134xf32> to vector<8x128xf32>
    %34 = tpu.concatenate %31, %32, %33 in 0 : vector<8x128xf32>, vector<8x128xf32>, vector<8x128xf32> -> vector<24x128xf32>
    %c0_11 = arith.constant 0 : index
    %c0_12 = arith.constant 0 : index
    %35 = vector.load %arg5[%c0_11, %c0_12] : memref<4x24xf32, #tpu.memory_space<vmem>>, vector<4x24xf32>
    %cst_13 = arith.constant dense<0.000000e+00> : vector<4x128xf32>
    %36 = tpu.matmul %35, %34, %cst_13 {dimension_numbers = #tpu.dot_dimension_numbers<[1], [0], [0], [1], [0, 0, 1, 1], [], []>} : vector<4x24xf32>, vector<24x128xf32>, vector<4x128xf32> -> vector<4x128xf32>
    %c0_14 = arith.constant 0 : index
    %c0_15 = arith.constant 0 : index
    %37 = vector.load %arg6[%c0_14, %c0_15] : memref<4x1xf32, #tpu.memory_space<vmem>>, vector<4x1xf32>
    %38 = vector.broadcast %37 : vector<4x1xf32> to vector<4x128xf32>
    %39 = arith.addf %36, %38 : vector<4x128xf32>
    %cst_16 = arith.constant 0.000000e+00 : f32
    %40 = vector.broadcast %cst_16 : f32 to vector<4x128xf32>
    %41 = arith.minimumf %39, %40 : vector<4x128xf32>
    %cst_17 = arith.constant 0.000000e+00 : f32
    %42 = vector.broadcast %cst_17 : f32 to vector<4x128xf32>
    %43 = arith.cmpf ogt, %39, %42 : vector<4x128xf32>
    %44 = math.exp %41 : vector<4x128xf32>
    %cst_18 = arith.constant 1.000000e+00 : f32
    %45 = vector.broadcast %cst_18 : f32 to vector<4x128xf32>
    %46 = arith.subf %44, %45 : vector<4x128xf32>
    %cst_19 = arith.constant 1.000000e-01 : f32
    %47 = vector.broadcast %cst_19 : f32 to vector<4x128xf32>
    %48 = arith.mulf %47, %46 : vector<4x128xf32>
    %49 = arith.select %43, %39, %48 : vector<4x128xi1>, vector<4x128xf32>
    %c0_20 = arith.constant 0 : index
    %c0_21 = arith.constant 0 : index
    %50 = vector.load %arg7[%c0_20, %c0_21] : memref<8x4xf32, #tpu.memory_space<vmem>>, vector<8x4xf32>
    %cst_22 = arith.constant dense<0.000000e+00> : vector<8x128xf32>
    %51 = tpu.matmul %50, %49, %cst_22 {dimension_numbers = #tpu.dot_dimension_numbers<[1], [0], [0], [1], [0, 0, 1, 1], [], []>} : vector<8x4xf32>, vector<4x128xf32>, vector<8x128xf32> -> vector<8x128xf32>
    %c0_23 = arith.constant 0 : index
    %c0_24 = arith.constant 0 : index
    %52 = vector.load %arg8[%c0_23, %c0_24] : memref<8x1xf32, #tpu.memory_space<vmem>>, vector<8x1xf32>
    %53 = vector.broadcast %52 : vector<8x1xf32> to vector<8x128xf32>
    %54 = arith.addf %51, %53 : vector<8x128xf32>
    %55 = arith.addf %1, %54 : vector<8x128xf32>
    %c0_25 = arith.constant 0 : index
    %c0_26 = arith.constant 0 : index
    %c0_27 = arith.constant 0 : index
    %56 = vector.load %arg9[%c0_25, %c0_26, %c0_27] : memref<1x8x128xf32, #tpu.memory_space<vmem>>, vector<1x8x128xf32>
    %57 = vector.shape_cast %56 : vector<1x8x128xf32> to vector<8x128xf32>
    %58 = vector.shape_cast %55 : vector<8x128xf32> to vector<1x8x128xf32>
    tpu.vector_store %arg9[%c0_25, %c0_26, %c0_27], %58 {strides = array<i32>} : memref<1x8x128xf32, #tpu.memory_space<vmem>>, vector<1x8x128xf32>,
    return
  }
  func.func @transform_0(%arg0: i32, %arg1: i32) -> (i32, i32, i32) {
    %c0_i32 = arith.constant 0 : i32
    %c0_i32_0 = arith.constant 0 : i32
    return %arg1, %c0_i32, %arg0 : i32, i32, i32
  }
  func.func @transform_1(%arg0: i32, %arg1: i32) -> (i32, i32, i32) {
    %c1_i32 = arith.constant 1 : i32
    %0 = arith.muli %arg0, %c1_i32 : i32
    %c1_i32_0 = arith.constant 1 : i32
    %1 = arith.subi %0, %c1_i32_0 : i32
    %c0_i32 = arith.constant 0 : i32
    %2 = arith.maxsi %1, %c0_i32 : i32
    %c0_i32_1 = arith.constant 0 : i32
    %c0_i32_2 = arith.constant 0 : i32
    return %arg1, %c0_i32_1, %2 : i32, i32, i32
  }
  func.func @transform_2(%arg0: i32, %arg1: i32) -> (i32, i32, i32) {
    %c1_i32 = arith.constant 1 : i32
    %0 = arith.addi %arg0, %c1_i32 : i32
    %c1_i32_0 = arith.constant 1 : i32
    %1 = arith.muli %0, %c1_i32_0 : i32
    %c3_i32 = arith.constant 3 : i32
    %2 = arith.minsi %1, %c3_i32 : i32
    %c0_i32 = arith.constant 0 : i32
    %c0_i32_1 = arith.constant 0 : i32
    return %arg1, %c0_i32, %2 : i32, i32, i32
  }
  func.func @transform_3(%arg0: i32, %arg1: i32) -> (i32, i32) {
    %c0_i32 = arith.constant 0 : i32
    %c0_i32_0 = arith.constant 0 : i32
    %c0_i32_1 = arith.constant 0 : i32
    return %c0_i32, %c0_i32_0 : i32, i32
  }
  func.func @transform_4(%arg0: i32, %arg1: i32) -> (i32, i32) {
    %c0_i32 = arith.constant 0 : i32
    %c0_i32_0 = arith.constant 0 : i32
    %c0_i32_1 = arith.constant 0 : i32
    return %c0_i32, %c0_i32_0 : i32, i32
  }
  func.func @transform_5(%arg0: i32, %arg1: i32) -> (i32, i32) {
    %c0_i32 = arith.constant 0 : i32
    %c0_i32_0 = arith.constant 0 : i32
    %c0_i32_1 = arith.constant 0 : i32
    return %c0_i32, %c0_i32_0 : i32, i32
  }
  func.func @transform_6(%arg0: i32, %arg1: i32) -> (i32, i32) {
    %c0_i32 = arith.constant 0 : i32
    %c0_i32_0 = arith.constant 0 : i32
    %c0_i32_1 = arith.constant 0 : i32
    return %c0_i32, %c0_i32_0 : i32, i32
  }
  func.func @transform_7(%arg0: i32, %arg1: i32) -> (i32, i32, i32) {
    %c0_i32 = arith.constant 0 : i32
    %c0_i32_0 = arith.constant 0 : i32
    return %arg1, %c0_i32, %arg0 : i32, i32, i32
  }
}

</mosaic_0001>

<llo_original>
// kernel: tpu_custom_call.1
$region0: #{tpu_custom_call.1}
  #allocation0 [shape = 'u32[]', space=smem, size = 0x4, offset = 0x4, fixed_abs, tag = 'smem constant byte address 0x4 - core index']
  #allocation1 [shape = 'u32[72,128]{1,0:T(1,128)}', space=vmem, size = 0x9000, scoped, tag = 'internal scratch']
  %s0 = inlined_call_operand.hbm [shape: f32[2,8,512], index: 0, kind: input, shape index: {}]
  %s1 = inlined_call_operand.hbm [shape: f32[2,8,512], index: 1, kind: input, shape index: {}]
  %s2 = inlined_call_operand.hbm [shape: f32[2,8,512], index: 2, kind: input, shape index: {}]
  %s3 = inlined_call_operand.vmem [shape: f32[4,24], index: 3, kind: input, shape index: {}]
  %s4 = inlined_call_operand.vmem [shape: f32[4,1], index: 4, kind: input, shape index: {}]
  %s5 = inlined_call_operand.vmem [shape: f32[8,4], index: 5, kind: input, shape index: {}]
  %s6 = inlined_call_operand.vmem [shape: f32[8,1], index: 6, kind: input, shape index: {}]
  %s7 = inlined_call_operand.hbm [shape: f32[2,8,512], index: 7, kind: output, shape index: {}]
  %s8 = sld [smem:[#allocation0]]
  $region73: #{tpu_custom_call.1} parent=0
    _
  %s10 = ssub.s32 1, %s8
  %s11 = scalar_select 0, %s10, %s8
  $region1: #{tpu_custom_call.1} parent=0
    #allocation2 [shape = 'u8[8192]{0}', space=vmem, size = 0x2000, scoped, tag = 'input window, operand 0']
    #allocation3 [shape = 's32[2]{0}', space=sflag, size = 0x8, scoped, tag = 'scoped memory for tpu_custom_call.1']
    #allocation4 [shape = 's32[2]{0}', space=sflag, size = 0x8, scoped, tag = 'scoped memory for tpu_custom_call.1']
    #allocation5 [shape = 'u8[8192]{0}', space=vmem, size = 0x2000, scoped, tag = 'input window, operand 1']
    #allocation6 [shape = 's32[2]{0}', space=sflag, size = 0x8, scoped, tag = 'scoped memory for tpu_custom_call.1']
    #allocation7 [shape = 'u8[8192]{0}', space=vmem, size = 0x2000, scoped, tag = 'input window, operand 2']
    #allocation8 [shape = 'u8[8192]{0}', space=vmem, size = 0x2000, scoped, tag = 'output window, operand 0']
    %12 = vsyncpa [#allocation3], 0
    %s13 = scalar_lea.sflag [#allocation3], 1
    %14 = vsyncpa %s13, 0
    %15 = vsyncpa [#allocation6], 0
    %s16 = scalar_lea.sflag [#allocation6], 1
    %17 = vsyncpa %s16, 0
    %18 = vsyncpa [#allocation4], 0
    %s19 = scalar_lea.sflag [#allocation4], 1
    %20 = vsyncpa %s19, 0
    loop: start=0, step=1, limit=10
    $region2: #{tpu_custom_call.1} parent=1 // loop_pre_header
      _
    $region3: #{tpu_custom_call.1} parent=1 // loop_header
      %s22 = sphi 0, %s26
      %p23 = scmp.ge.s32.totalorder %s22, 10
      %s29 = sphi 0, %s41
      %s30 = sphi 0, %s37
      %s31 = sphi 0, %s29
      %s32 = sphi 0, %s30
      %s33 = sphi 0, %s31
      %s34 = sphi 0, %s32
      %s46 = sphi 0, %s48
      %s49 = sphi 0, %s46
      %s50 = sphi 0, %s49
      %s66 = sphi 0, %s50
      %s80 = sphi 0, %s82
      %s83 = sphi 0, %s80
      %s84 = sphi 0, %s83
      %s100 = sphi 0, %s84
      %s114 = sphi 0, %s116
      %s117 = sphi 0, %s114
      %s118 = sphi 0, %s117
      %s134 = sphi 0, %s118
      %s138 = sphi 0, %s138
      %s140 = sphi 0, %s138
      %s141 = sphi 0, %s140
      %s155 = sphi 0, %s141
      %s159 = sphi 0, %s159
      %s161 = sphi 0, %s159
      %s162 = sphi 0, %s161
      %s176 = sphi 0, %s162
      %s180 = sphi 0, %s180
      %s182 = sphi 0, %s180
      %s183 = sphi 0, %s182
      %s197 = sphi 0, %s183
      %s201 = sphi 0, %s201
      %s203 = sphi 0, %s201
      %s204 = sphi 0, %s203
      %s218 = sphi 0, %s204
      %s226 = sphi 0, %s228
      %s229 = sphi 0, %s226
      %s230 = sphi 0, %s229
      %s246 = sphi 0, %s230
    $region4: #{tpu_custom_call.1} parent=1 // loop_header_branch
      %25 = sbr.rel (%p23) target = $region8
    $region5: #{tpu_custom_call.1} parent=1 // loop_body
      %s27 = ssub.s32 %s22, 1
      %s28 = ssub.s32 %s22, 2
      %s35 = sadd.s32 1, %s30
      %p36 = scmp.ge.s32.totalorder %s35, 2
      %s37 = scalar_select %p36, 0, %s35
      %s38 = sadd.s32 1, %s29
      %s39 = scalar_select %p36, %s38, %s29
      %p40 = scmp.ge.s32.totalorder %s39, 4
      %s41 = scalar_select %p40, 0, %s39
      %s42 = ssub.s32 %s30, %s37
      %s43 = ssub.s32 %s29, %s41
      %s44 = sor.u32 %s42, %s43
      %p45 = scmp.eq.s32.totalorder %s44, 0
      %s47 = sadd.s32 %s46, 1
      %s48 = scalar_select %p45, %s46, %s47
      %p51 = pneg %p45
      %p52 = scmp.eq.s32.totalorder %s22, 7
      %p53 = por %p51, %p52
      %p54 = scmp.ne.s32.totalorder %s46, %s49
      %p55 = scmp.eq.s32.totalorder %s22, 0
      %p56 = por %p54, %p55
      %p57 = scmp.ne.s32.totalorder %s46, %s49
      %p58 = scmp.eq.s32.totalorder %s27, 7
      %p59 = por %p57, %p58
      %p60 = scmp.ne.s32.totalorder %s49, %s50
      %p61 = scmp.eq.s32.totalorder %s27, 0
      %p62 = por %p60, %p61
      %p63 = scmp.ne.s32.totalorder %s49, %s50
      %p64 = scmp.eq.s32.totalorder %s28, 7
      %p65 = por %p63, %p64
      %p67 = scmp.ne.s32.totalorder %s50, %s66
      %p68 = scmp.eq.s32.totalorder %s28, 0
      %p69 = por %p67, %p68
      %s70 = ssub.s32 %s29, 1
      %p71 = scmp.gt.s32.totalorder %s70, 0
      %s72 = scalar_select %p71, %s70, 0
      %s73 = ssub.s32 %s41, 1
      %p74 = scmp.gt.s32.totalorder %s73, 0
      %s75 = scalar_select %p74, %s73, 0
      %s76 = ssub.s32 %s30, %s37
      %s77 = ssub.s32 %s72, %s75
      %s78 = sor.u32 %s76, %s77
      %p79 = scmp.eq.s32.totalorder %s78, 0
      %s81 = sadd.s32 %s80, 1
      %s82 = scalar_select %p79, %s80, %s81
      %p85 = pneg %p79
      %p86 = scmp.eq.s32.totalorder %s22, 7
      %p87 = por %p85, %p86
      %p88 = scmp.ne.s32.totalorder %s80, %s83
      %p89 = scmp.eq.s32.totalorder %s22, 0
      %p90 = por %p88, %p89
      %p91 = scmp.ne.s32.totalorder %s80, %s83
      %p92 = scmp.eq.s32.totalorder %s27, 7
      %p93 = por %p91, %p92
      %p94 = scmp.ne.s32.totalorder %s83, %s84
      %p95 = scmp.eq.s32.totalorder %s27, 0
      %p96 = por %p94, %p95
      %p97 = scmp.ne.s32.totalorder %s83, %s84
      %p98 = scmp.eq.s32.totalorder %s28, 7
      %p99 = por %p97, %p98
      %p101 = scmp.ne.s32.totalorder %s84, %s100
      %p102 = scmp.eq.s32.totalorder %s28, 0
      %p103 = por %p101, %p102
      %s104 = sadd.s32 %s29, 1
      %p105 = scmp.lt.s32.totalorder %s104, 3
      %s106 = scalar_select %p105, %s104, 3
      %s107 = sadd.s32 %s41, 1
      %p108 = scmp.lt.s32.totalorder %s107, 3
      %s109 = scalar_select %p108, %s107, 3
      %s110 = ssub.s32 %s30, %s37
      %s111 = ssub.s32 %s106, %s109
      %s112 = sor.u32 %s110, %s111
      %p113 = scmp.eq.s32.totalorder %s112, 0
      %s115 = sadd.s32 %s114, 1
      %s116 = scalar_select %p113, %s114, %s115
      %p119 = pneg %p113
      %p120 = scmp.eq.s32.totalorder %s22, 7
      %p121 = por %p119, %p120
      %p122 = scmp.ne.s32.totalorder %s114, %s117
      %p123 = scmp.eq.s32.totalorder %s22, 0
      %p124 = por %p122, %p123
      %p125 = scmp.ne.s32.totalorder %s114, %s117
      %p126 = scmp.eq.s32.totalorder %s27, 7
      %p127 = por %p125, %p126
      %p128 = scmp.ne.s32.totalorder %s117, %s118
      %p129 = scmp.eq.s32.totalorder %s27, 0
      %p130 = por %p128, %p129
      %p131 = scmp.ne.s32.totalorder %s117, %s118
      %p132 = scmp.eq.s32.totalorder %s28, 7
      %p133 = por %p131, %p132
      %p135 = scmp.ne.s32.totalorder %s118, %s134
      %p136 = scmp.eq.s32.totalorder %s28, 0
      %p137 = por %p135, %p136
      %s139 = sadd.s32 %s138, 1
      %p142 = scmp.eq.s32.totalorder %s22, 7
      %p143 = scmp.ne.s32.totalorder %s138, %s140
      %p144 = scmp.eq.s32.totalorder %s22, 0
      %p145 = por %p143, %p144
      %p146 = scmp.ne.s32.totalorder %s138, %s140
      %p147 = scmp.eq.s32.totalorder %s27, 7
      %p148 = por %p146, %p147
      %p149 = scmp.ne.s32.totalorder %s140, %s141
      %p150 = scmp.eq.s32.totalorder %s27, 0
      %p151 = por %p149, %p150
      %p152 = scmp.ne.s32.totalorder %s140, %s141
      %p153 = scmp.eq.s32.totalorder %s28, 7
      %p154 = por %p152, %p153
      %p156 = scmp.ne.s32.totalorder %s141, %s155
      %p157 = scmp.eq.s32.totalorder %s28, 0
      %p158 = por %p156, %p157
      %s160 = sadd.s32 %s159, 1
      %p163 = scmp.eq.s32.totalorder %s22, 7
      %p164 = scmp.ne.s32.totalorder %s159, %s161
      %p165 = scmp.eq.s32.totalorder %s22, 0
      %p166 = por %p164, %p165
      %p167 = scmp.ne.s32.totalorder %s159, %s161
      %p168 = scmp.eq.s32.totalorder %s27, 7
      %p169 = por %p167, %p168
      %p170 = scmp.ne.s32.totalorder %s161, %s162
      %p171 = scmp.eq.s32.totalorder %s27, 0
      %p172 = por %p170, %p171
      %p173 = scmp.ne.s32.totalorder %s161, %s162
      %p174 = scmp.eq.s32.totalorder %s28, 7
      %p175 = por %p173, %p174
      %p177 = scmp.ne.s32.totalorder %s162, %s176
      %p178 = scmp.eq.s32.totalorder %s28, 0
      %p179 = por %p177, %p178
      %s181 = sadd.s32 %s180, 1
      %p184 = scmp.eq.s32.totalorder %s22, 7
      %p185 = scmp.ne.s32.totalorder %s180, %s182
      %p186 = scmp.eq.s32.totalorder %s22, 0
      %p187 = por %p185, %p186
      %p188 = scmp.ne.s32.totalorder %s180, %s182
      %p189 = scmp.eq.s32.totalorder %s27, 7
      %p190 = por %p188, %p189
      %p191 = scmp.ne.s32.totalorder %s182, %s183
      %p192 = scmp.eq.s32.totalorder %s27, 0
      %p193 = por %p191, %p192
      %p194 = scmp.ne.s32.totalorder %s182, %s183
      %p195 = scmp.eq.s32.totalorder %s28, 7
      %p196 = por %p194, %p195
      %p198 = scmp.ne.s32.totalorder %s183, %s197
      %p199 = scmp.eq.s32.totalorder %s28, 0
      %p200 = por %p198, %p199
      %s202 = sadd.s32 %s201, 1
      %p205 = scmp.eq.s32.totalorder %s22, 7
      %p206 = scmp.ne.s32.totalorder %s201, %s203
      %p207 = scmp.eq.s32.totalorder %s22, 0
      %p208 = por %p206, %p207
      %p209 = scmp.ne.s32.totalorder %s201, %s203
      %p210 = scmp.eq.s32.totalorder %s27, 7
      %p211 = por %p209, %p210
      %p212 = scmp.ne.s32.totalorder %s203, %s204
      %p213 = scmp.eq.s32.totalorder %s27, 0
      %p214 = por %p212, %p213
      %p215 = scmp.ne.s32.totalorder %s203, %s204
      %p216 = scmp.eq.s32.totalorder %s28, 7
      %p217 = por %p215, %p216
      %p219 = scmp.ne.s32.totalorder %s204, %s218
      %p220 = scmp.eq.s32.totalorder %s28, 0
      %p221 = por %p219, %p220
      %s222 = ssub.s32 %s30, %s37
      %s223 = ssub.s32 %s29, %s41
      %s224 = sor.u32 %s222, %s223
      %p225 = scmp.eq.s32.totalorder %s224, 0
      %s227 = sadd.s32 %s226, 1
      %s228 = scalar_select %p225, %s226, %s227
      %p231 = pneg %p225
      %p232 = scmp.eq.s32.totalorder %s22, 7
      %p233 = por %p231, %p232
      %p234 = scmp.ne.s32.totalorder %s226, %s229
      %p235 = scmp.eq.s32.totalorder %s22, 0
      %p236 = por %p234, %p235
      %p237 = scmp.ne.s32.totalorder %s226, %s229
      %p238 = scmp.eq.s32.totalorder %s27, 7
      %p239 = por %p237, %p238
      %p240 = scmp.ne.s32.totalorder %s229, %s230
      %p241 = scmp.eq.s32.totalorder %s27, 0
      %p242 = por %p240, %p241
      %p243 = scmp.ne.s32.totalorder %s229, %s230
      %p244 = scmp.eq.s32.totalorder %s28, 7
      %p245 = por %p243, %p244
      %p247 = scmp.ne.s32.totalorder %s230, %s246
      %p248 = scmp.eq.s32.totalorder %s28, 0
      %p249 = por %p247, %p248
      %p250 = scmp.le.s32.totalorder 1, %s22
      %p251 = scmp.lt.s32.totalorder %s22, 9
      %p252 = pnand %p250, %p251
      %p253 = pneg %p252
      // Predicated region
      $region9: #{tpu_custom_call.1} parent=5 // pred_check
        _
      $region10: #{tpu_custom_call.1} parent=5 // pred_check_branch
        %255 = sbr.rel (%p252) target = $region12
      $region11: #{tpu_custom_call.1} parent=5 // pred_region
        %s256 = ssub.s32 %s22, 1
        // Predicated region
        $region13: #{tpu_custom_call.1} parent=11 // pred_check
          %p257 = pneg %p151
        $region14: #{tpu_custom_call.1} parent=11 // pred_check_branch
          %259 = sbr.rel (%p257) target = $region16
        $region15: #{tpu_custom_call.1} parent=11 // pred_region
          _
        $region16: #{tpu_custom_call.1} parent=11 // pred_fallthru
          _
        // Predicated region
        $region17: #{tpu_custom_call.1} parent=11 // pred_check
          %p260 = pneg %p172
        $region18: #{tpu_custom_call.1} parent=11 // pred_check_branch
          %262 = sbr.rel (%p260) target = $region20
        $region19: #{tpu_custom_call.1} parent=11 // pred_region
          _
        $region20: #{tpu_custom_call.1} parent=11 // pred_fallthru
          _
        // Predicated region
        $region21: #{tpu_custom_call.1} parent=11 // pred_check
          %p263 = pneg %p193
        $region22: #{tpu_custom_call.1} parent=11 // pred_check_branch
          %265 = sbr.rel (%p263) target = $region24
        $region23: #{tpu_custom_call.1} parent=11 // pred_region
          _
        $region24: #{tpu_custom_call.1} parent=11 // pred_fallthru
          _
        // Predicated region
        $region25: #{tpu_custom_call.1} parent=11 // pred_check
          %p266 = pneg %p214
        $region26: #{tpu_custom_call.1} parent=11 // pred_check_branch
          %268 = sbr.rel (%p266) target = $region28
        $region27: #{tpu_custom_call.1} parent=11 // pred_region
          _
        $region28: #{tpu_custom_call.1} parent=11 // pred_fallthru
          _
      $region12: #{tpu_custom_call.1} parent=5 // pred_fallthru
        _
      %p269 = scmp.lt.s32.totalorder %s22, 8
      // Predicated region
      $region29: #{tpu_custom_call.1} parent=5 // pred_check
        %p270 = pneg %p269
      $region30: #{tpu_custom_call.1} parent=5 // pred_check_branch
        %272 = sbr.rel (%p270) target = $region32
      $region31: #{tpu_custom_call.1} parent=5 // pred_region
        // Predicated region
        $region33: #{tpu_custom_call.1} parent=31 // pred_check
          %p273 = pneg %p56
        $region34: #{tpu_custom_call.1} parent=31 // pred_check_branch
          %275 = sbr.rel (%p273) target = $region36
        $region35: #{tpu_custom_call.1} parent=31 // pred_region
          %s276 = sand.u32 %s46, 1
          %s277 = scalar_lea.sflag [#allocation3], %s276
          %s278 = sand.u32 %s46, 1
          %s279 = smul.addr %s278, 8
          %s280 = scalar_lea.vmem [#allocation2], %s279
          %282 = vsyncadd %s277, 0
          %s283 = smul.addr %s30, 4
          %s284 = sadd.s32 %s29, %s283
          %s285 = smul.addr %s284, 8
          %s286 = scalar_lea.hbm %s0, %s285
          %s288 = sshll.u32 %s286, 4
          %s289 = int_to_ptr.hbm [resolvable:$true] %s288
          %s290 = sshll.u32 %s280, 4
          %s291 = int_to_ptr.vmem [resolvable:$true] %s290
          %293 = dma.hbm_to_vmem [thread:$0]  %s289, 128, %s291, %s277
        $region36: #{tpu_custom_call.1} parent=31 // pred_fallthru
          _
        // Predicated region
        $region37: #{tpu_custom_call.1} parent=31 // pred_check
          %p294 = pneg %p90
        $region38: #{tpu_custom_call.1} parent=31 // pred_check_branch
          %296 = sbr.rel (%p294) target = $region40
        $region39: #{tpu_custom_call.1} parent=31 // pred_region
          %s297 = sand.u32 %s22, 1
          %s298 = scalar_lea.sflag [#allocation6], %s297
          %s299 = sand.u32 %s80, 1
          %s300 = smul.addr %s299, 8
          %s301 = scalar_lea.vmem [#allocation5], %s300
          %s302 = ssub.s32 %s29, 1
          %p303 = scmp.gt.s32.totalorder %s302, 0
          %s304 = scalar_select %p303, %s302, 0
          %306 = vsyncadd %s298, 0
          %s307 = smul.addr %s30, 4
          %s308 = sadd.s32 %s304, %s307
          %s309 = smul.addr %s308, 8
          %s310 = scalar_lea.hbm %s1, %s309
          %s312 = sshll.u32 %s310, 4
          %s313 = int_to_ptr.hbm [resolvable:$true] %s312
          %s314 = sshll.u32 %s301, 4
          %s315 = int_to_ptr.vmem [resolvable:$true] %s314
          %317 = dma.hbm_to_vmem [thread:$0]  %s313, 128, %s315, %s298
        $region40: #{tpu_custom_call.1} parent=31 // pred_fallthru
          _
        // Predicated region
        $region41: #{tpu_custom_call.1} parent=31 // pred_check
          %p318 = pneg %p124
        $region42: #{tpu_custom_call.1} parent=31 // pred_check_branch
          %320 = sbr.rel (%p318) target = $region44
        $region43: #{tpu_custom_call.1} parent=31 // pred_region
          %s321 = sand.u32 %s22, 1
          %s322 = scalar_lea.sflag [#allocation6], %s321
          %s323 = sand.u32 %s114, 1
          %s324 = smul.addr %s323, 8
          %s325 = scalar_lea.vmem [#allocation7], %s324
          %s326 = sadd.s32 %s29, 1
          %p327 = scmp.lt.s32.totalorder %s326, 3
          %s328 = scalar_select %p327, %s326, 3
          %330 = vsyncadd %s322, 0
          %s331 = smul.addr %s30, 4
          %s332 = sadd.s32 %s328, %s331
          %s333 = smul.addr %s332, 8
          %s334 = scalar_lea.hbm %s2, %s333
          %s336 = sshll.u32 %s334, 4
          %s337 = int_to_ptr.hbm [resolvable:$true] %s336
          %s338 = sshll.u32 %s325, 4
          %s339 = int_to_ptr.vmem [resolvable:$true] %s338
          %341 = dma.hbm_to_vmem [thread:$0]  %s337, 128, %s339, %s322
        $region44: #{tpu_custom_call.1} parent=31 // pred_fallthru
          _
      $region32: #{tpu_custom_call.1} parent=5 // pred_fallthru
        _
      %p342 = scmp.le.s32.totalorder 1, %s22
      %p343 = scmp.lt.s32.totalorder %s22, 9
      %p344 = pnand %p342, %p343
      %p345 = pneg %p344
      // Predicated region
      $region45: #{tpu_custom_call.1} parent=5 // pred_check
        _
      $region46: #{tpu_custom_call.1} parent=5 // pred_check_branch
        %347 = sbr.rel (%p344) target = $region48
      $region47: #{tpu_custom_call.1} parent=5 // pred_region
        %s348 = ssub.s32 %s22, 1
        %s349 = sand.u32 %s49, 1
        %s350 = scalar_lea.sflag [#allocation3], %s349
        %s351 = sand.u32 %s49, 1
        %s352 = smul.addr %s351, 8
        %s353 = scalar_lea.vmem [#allocation2], %s352
        // Predicated region
        $region49: #{tpu_custom_call.1} parent=47 // pred_check
          %p354 = pneg %p62
        $region50: #{tpu_custom_call.1} parent=47 // pred_check_branch
          %356 = sbr.rel (%p354) target = $region52
        $region51: #{tpu_custom_call.1} parent=47 // pred_region
          %358 = dma.done %s350, 128
        $region52: #{tpu_custom_call.1} parent=47 // pred_fallthru
          _
        %s359 = sand.u32 %s27, 1
        %s360 = scalar_lea.sflag [#allocation6], %s359
        %s361 = sand.u32 %s83, 1
        %s362 = smul.addr %s361, 8
        %s363 = scalar_lea.vmem [#allocation5], %s362
        // Predicated region
        $region53: #{tpu_custom_call.1} parent=47 // pred_check
          %p364 = pneg %p96
        $region54: #{tpu_custom_call.1} parent=47 // pred_check_branch
          %366 = sbr.rel (%p364) target = $region56
        $region55: #{tpu_custom_call.1} parent=47 // pred_region
          %368 = dma.done %s360, 128
        $region56: #{tpu_custom_call.1} parent=47 // pred_fallthru
          _
        %s369 = sand.u32 %s27, 1
        %s370 = scalar_lea.sflag [#allocation6], %s369
        %s371 = sand.u32 %s117, 1
        %s372 = smul.addr %s371, 8
        %s373 = scalar_lea.vmem [#allocation7], %s372
        // Predicated region
        $region57: #{tpu_custom_call.1} parent=47 // pred_check
          %p374 = pneg %p130
        $region58: #{tpu_custom_call.1} parent=47 // pred_check_branch
          %376 = sbr.rel (%p374) target = $region60
        $region59: #{tpu_custom_call.1} parent=47 // pred_region
          %378 = dma.done %s370, 128
        $region60: #{tpu_custom_call.1} parent=47 // pred_fallthru
          _
        %s379 = sand.u32 %s49, 1
        %s380 = scalar_lea.sflag [#allocation3], %s379
        %s381 = sand.u32 %s49, 1
        %s382 = smul.addr %s381, 8
        %s383 = scalar_lea.vmem [#allocation2], %s382
        %p384 = pneg %p62
        %p385 = pneg %p59
        %s386 = sand.u32 %s27, 1
        %s387 = scalar_lea.sflag [#allocation6], %s386
        %s388 = sand.u32 %s83, 1
        %s389 = smul.addr %s388, 8
        %s390 = scalar_lea.vmem [#allocation5], %s389
        %p391 = pneg %p96
        %p392 = pneg %p93
        %s393 = sand.u32 %s27, 1
        %s394 = scalar_lea.sflag [#allocation6], %s393
        %s395 = sand.u32 %s117, 1
        %s396 = smul.addr %s395, 8
        %s397 = scalar_lea.vmem [#allocation7], %s396
        %p398 = pneg %p130
        %p399 = pneg %p127
        %p400 = pneg %p151
        %p401 = pneg %p148
        %p402 = pneg %p172
        %p403 = pneg %p169
        %p404 = pneg %p193
        %p405 = pneg %p190
        %p406 = pneg %p214
        %p407 = pneg %p211
        %p408 = pneg %p242
        %p409 = pneg %p239
        %s410 = sand.u32 %s229, 1
        %s411 = scalar_lea.sflag [#allocation4], %s410
        %s412 = sand.u32 %s229, 1
        %s413 = smul.addr %s412, 8
        %s414 = scalar_lea.vmem [#allocation8], %s413
        %s415 = ssub.s32 %s31, 1
        %p416 = scmp.gt.s32.totalorder %s415, 0
        %s417 = scalar_select %p416, %s415, 0
        %s418 = sadd.s32 %s31, 1
        %p419 = scmp.lt.s32.totalorder %s418, 3
        %s420 = scalar_select %p419, %s418, 3
        %v421 = vld [vmem:[%s353] sm:$0xff]
        %v422 = vld [vmem:[%s363] sm:$0xff]
        %v423 = vld [vmem:[%s373] sm:$0xff]
        %425 = vrot.lane.b32.xlu0 %v422, 125
        %v426 = vpop.permute.xlu0 %425
        %428 = vrot.lane.b32.xlu0 %v422, 127
        %v429 = vpop.permute.xlu0 %428
        %431 = vrot.lane.b32.xlu0 %v422, 1
        %v432 = vpop.permute.xlu0 %431
        %vm434 = vcmask 7168
        %v435 = vsel %vm434, %v426, %v429
        %vm436 = vcmask 15360
        %v437 = vsel %vm436, %v435, %v432
        %p438 = scmp.eq.s32.totalorder %s31, 0
        %s439 = scalar_select %p438, 1, 0
        %v440 = vstv %s439
        %vm441 = vcmp.eq.s32.totalorder %v440, 1
        %442 = vrot.lane.b32.xlu0 %v422, 3
        %v443 = vpop.permute.xlu0 %442
        %v445 = vsel %vm441, %v437, %v443
        %447 = vrot.lane.b32.xlu0 %v423, 2
        %v448 = vpop.permute.xlu0 %447
        %450 = vrot.lane.b32.xlu0 %v423, 4
        %v451 = vpop.permute.xlu0 %450
        %453 = vrot.lane.b32.xlu0 %v423, 6
        %v454 = vpop.permute.xlu0 %453
        %v456 = vsel %vm434, %v448, %v451
        %v457 = vsel %vm436, %v456, %v454
        %p458 = scmp.eq.s32.totalorder %s31, 3
        %s459 = scalar_select %p458, 1, 0
        %v460 = vstv %s459
        %vm461 = vcmp.eq.s32.totalorder %v460, 1
        %v462 = vsel %vm461, %v457, %v423
        %464 = vrot.lane.b32.xlu0 %v421, 3
        %v465 = vpop.permute.xlu0 %464
        %468 = vrot.lane.b32.xlu0 %v462, 3
        %v469 = vpop.permute.xlu0 %468
        %vm471 = vcmask 23552
        %v472 = vsel %vm471, %v445, %v465
        %v473 = vsel %vm471, %v465, %v469
        %v474 = vmin.f32 %v472, 0.0
        %v475 = vmin.f32 %v473, 0.0
        %vm476 = vcmp.gt.f32.partialorder %v472, 0.0
        %vm477 = vcmp.gt.f32.partialorder %v473, 0.0
        %v478 = vmul.f32 %v474, 1.442695
        %v479 = vpow.pop %v478
        %v480 = vmul.f32 %v475, 1.442695
        %v481 = vpow.pop %v480
        %v482 = vsub.f32 %v479, 1.0
        %v483 = vsub.f32 %v481, 1.0
        %v484 = vmul.f32 %v482, 0.1
        %v485 = vmul.f32 %v483, 0.1
        %v486 = vsel %vm476, %v472, %v484
        %v487 = vsel %vm477, %v473, %v485
        %490 = vrot.lane.b32.xlu0 %v486, 125
        %v491 = vpop.permute.xlu0 %490
        %492 = vrot.lane.b32.xlu0 %v487, 125
        %v493 = vpop.permute.xlu0 %492
        %vm494 = vcmask 1022976
        %v495 = vsel %vm494, %v491, %v493
        %497 = vrot.lane.b32.xlu0 %v486, 122
        %v498 = vpop.permute.xlu0 %497
        %499 = vrot.lane.b32.xlu0 %v487, 122
        %v500 = vpop.permute.xlu0 %499
        %vm501 = vcmask 998400
        %v502 = vsel %vm501, %v498, %v500
        %v504 = vld [vmem:[%s3] sm:$0xf]
        %v505 = vld [vmem:[%s4] sm:$0xf]
        %507 = vset.pattern.permute.xlu0 0
        %508 = vperm.xlu0 %507, %v505
        %v509 = vpop.permute.xlu0 %508
        %vm511 = vcmask 195584
        %v513 = vsel %vm511, %v504, 0
        %515 = vmatpush.msra.mxu0 0.0
        %516 = vmatpush.msra.mxu0 0.0
        %517 = vmatpush.msra.mxu0 0.0
        %518 = vmatpush.msra.mxu0 0.0
        %519 = vmatpush.msra.mxu0 0.0
        %520 = vmatpush.msra.mxu0 0.0
        %521 = vmatpush.msra.mxu0 0.0
        %522 = vmatpush.msra.mxu0 0.0
        %523 = vmatpush.msra.mxu0 0.0
        %524 = vmatpush.msra.mxu0 0.0
        %525 = vmatpush.msra.mxu0 0.0
        %526 = vmatpush.msra.mxu0 0.0
        %527 = vmatpush.msra.mxu0 0.0
        %528 = vmatpush.msra.mxu0 %v502
        %529 = vmatpush.msra.mxu0 %v495
        %530 = vmatpush.msra.mxu0 %v486
        %531 = vmatmul.f32.gmra.mxu0 %v513
        %v532 = vpop.f32.mrf.mxu0
        %v533 = vadd.f32 %v509, %v532
        %534 = vdwg.mxu0
        %v535 = vmin.f32 %v533, 0.0
        %vm536 = vcmp.gt.f32.partialorder %v533, 0.0
        %v537 = vmul.f32 %v535, 1.442695
        %v538 = vpow.pop %v537
        %v539 = vsub.f32 %v538, 1.0
        %v540 = vmul.f32 %v539, 0.1
        %v541 = vsel %vm536, %v533, %v540
        %v542 = vld [vmem:[%s5] sm:$0xff]
        %v543 = vld [vmem:[%s6] sm:$0xff]
        %545 = vset.pattern.permute.xlu0 0
        %546 = vperm.xlu0 %545, %v543
        %v547 = vpop.permute.xlu0 %546
        %vm549 = vcmask 31744
        %v551 = vsel %vm549, %v542, 0
        %vm553 = vcmask 1043456
        %v555 = vsel %vm553, %v541, 0
        %557 = vmatpush.msra.mxu0 0.0
        %558 = vmatpush.msra.mxu0 0.0
        %559 = vmatpush.msra.mxu0 0.0
        %560 = vmatpush.msra.mxu0 0.0
        %561 = vmatpush.msra.mxu0 0.0
        %562 = vmatpush.msra.mxu0 0.0
        %563 = vmatpush.msra.mxu0 0.0
        %564 = vmatpush.msra.mxu0 0.0
        %565 = vmatpush.msra.mxu0 0.0
        %566 = vmatpush.msra.mxu0 0.0
        %567 = vmatpush.msra.mxu0 0.0
        %568 = vmatpush.msra.mxu0 0.0
        %569 = vmatpush.msra.mxu0 0.0
        %570 = vmatpush.msra.mxu0 0.0
        %571 = vmatpush.msra.mxu0 0.0
        %572 = vmatpush.msra.mxu0 %v555
        %573 = vmatmul.f32.gmra.mxu0 %v551
        %v574 = vpop.f32.mrf.mxu0
        %v575 = vadd.f32 %v547, %v574
        %576 = vdwg.mxu0
        %v577 = vadd.f32 %v421, %v575
        %578 = vst [vmem:[%s414] sm:$0xff] %v577
        %s579 = sand.u32 %s229, 1
        %s580 = scalar_lea.sflag [#allocation4], %s579
        %s581 = sand.u32 %s229, 1
        %s582 = smul.addr %s581, 8
        %s583 = scalar_lea.vmem [#allocation8], %s582
        // Predicated region
        $region61: #{tpu_custom_call.1} parent=47 // pred_check
          %p584 = pneg %p239
        $region62: #{tpu_custom_call.1} parent=47 // pred_check_branch
          %586 = sbr.rel (%p584) target = $region64
        $region63: #{tpu_custom_call.1} parent=47 // pred_region
          %588 = vsyncadd %s580, 0
          %s589 = smul.addr %s32, 4
          %s590 = sadd.s32 %s31, %s589
          %s591 = smul.addr %s590, 8
          %s592 = scalar_lea.hbm %s7, %s591
          %s594 = sshll.u32 %s583, 4
          %s595 = int_to_ptr.vmem [resolvable:$true] %s594
          %s596 = sshll.u32 %s592, 4
          %s597 = int_to_ptr.hbm [resolvable:$true] %s596
          %599 = dma.vmem_to_hbm [thread:$0]  %s595, 128, %s597, %s580
        $region64: #{tpu_custom_call.1} parent=47 // pred_fallthru
          _
      $region48: #{tpu_custom_call.1} parent=5 // pred_fallthru
        _
      %p600 = scmp.le.s32.totalorder 2, %s22
      // Predicated region
      $region65: #{tpu_custom_call.1} parent=5 // pred_check
        %p601 = pneg %p600
      $region66: #{tpu_custom_call.1} parent=5 // pred_check_branch
        %603 = sbr.rel (%p601) target = $region68
      $region67: #{tpu_custom_call.1} parent=5 // pred_region
        %s604 = ssub.s32 %s22, 2
        // Predicated region
        $region69: #{tpu_custom_call.1} parent=67 // pred_check
          %p605 = pneg %p245
        $region70: #{tpu_custom_call.1} parent=67 // pred_check_branch
          %607 = sbr.rel (%p605) target = $region72
        $region71: #{tpu_custom_call.1} parent=67 // pred_region
          %s608 = sand.u32 %s230, 1
          %s609 = scalar_lea.sflag [#allocation4], %s608
          %s610 = sand.u32 %s230, 1
          %s611 = smul.addr %s610, 8
          %s612 = scalar_lea.vmem [#allocation8], %s611
          %614 = dma.done %s609, 128
        $region72: #{tpu_custom_call.1} parent=67 // pred_fallthru
          _
      $region68: #{tpu_custom_call.1} parent=5 // pred_fallthru
        _
    $region6: #{tpu_custom_call.1} parent=1 // loop_footer
      %s26 = sadd.s32 1, %s22
    $region7: #{tpu_custom_call.1} parent=1 // loop_footer_branch
      %21 = sbr.rel target = $region3
    $region8: #{tpu_custom_call.1} parent=1 // loop_exit
      _
    %615 = vsyncpa [#allocation3], 1
    %s616 = scalar_lea.sflag [#allocation3], 1
    %617 = vsyncpa %s616, 1
    %618 = vsyncpa [#allocation6], 1
    %s619 = scalar_lea.sflag [#allocation6], 1
    %620 = vsyncpa %s619, 1
    %621 = vsyncpa [#allocation4], 1
    %s622 = scalar_lea.sflag [#allocation4], 1
    %623 = vsyncpa %s622, 1

</llo_original>
